<compile_context>
chip_gen: v7x
topology: tpu7x:2x2x1
jax: 0.10.0
libtpu: 0.0.40
codegen_flags: <defaults>
</compile_context>

<pallas_src>
import math

import jax
import jax.numpy as jnp
from jax.experimental import pallas as pl
from jax.experimental.pallas import tpu as pltpu


# ----------------------------------------------------------------------------
# Tile helper: largest sublane-aligned divisor of n that is <= target.
# ----------------------------------------------------------------------------
def _pick_tile(n: int, target: int) -> int:
    if n <= target:
        return n
    t = min(target, n)
    while t >= 8:
        if n % t == 0 and t % 8 == 0:
            return t
        t -= 1
    # No aligned divisor found (odd sequence length) -- fall back to the full
    # extent, which is always a legal block shape.
    return n


# ----------------------------------------------------------------------------
# Flash-style cross-attention kernel (online softmax).
# ----------------------------------------------------------------------------
def _flash_cross_attn_kernel(q_ref, k_ref, v_ref, o_ref, m_sc, l_sc, acc_sc):
    # q_ref: (1, tq, D)    k_ref, v_ref: (1, tk, D)    o_ref: (1, tq, D)
    kv = pl.program_id(2)

    @pl.when(kv == 0)
    def _():
        m_sc[...] = jnp.full_like(m_sc, -jnp.inf)
        l_sc[...] = jnp.zeros_like(l_sc)
        acc_sc[...] = jnp.zeros_like(acc_sc)

    scale = 1.0 / math.sqrt(q_ref.shape[-1])
    # (1, tq, tk) scores in f32 on the MXU.
    s = jnp.einsum(
        "bqd,bkd->bqk", q_ref[...], k_ref[...],
        preferred_element_type=jnp.float32,
    ) * scale

    m_prev = m_sc[...]
    m_new = jnp.maximum(m_prev, s.max(axis=-1, keepdims=True))
    alpha = jnp.exp(m_prev - m_new)
    p = jnp.exp(s - m_new)

    l_sc[...] = alpha * l_sc[...] + p.sum(axis=-1, keepdims=True)
    acc_sc[...] = alpha * acc_sc[...] + jnp.einsum(
        "bqk,bkd->bqd", p.astype(v_ref.dtype), v_ref[...],
        preferred_element_type=jnp.float32,
    )
    m_sc[...] = m_new

    @pl.when(kv == pl.num_programs(2) - 1)
    def _():
        o_ref[...] = (acc_sc[...] / l_sc[...]).astype(o_ref.dtype)


def flash_cross_attention(q, k, v, *, tq_target: int = 256, tk_target: int = 512):
    """softmax(q k^T / sqrt(D)) v, batched over the leading axis."""
    B, Nq, D = q.shape
    Bk, Nk, Dk = k.shape
    assert B == Bk and D == Dk and v.shape == k.shape

    tq = _pick_tile(Nq, tq_target)
    tk = _pick_tile(Nk, tk_target)
    grid = (B, Nq // tq, Nk // tk)

    return pl.pallas_call(
        _flash_cross_attn_kernel,
        out_shape=jax.ShapeDtypeStruct((B, Nq, D), q.dtype),
        grid_spec=pltpu.PrefetchScalarGridSpec(
            num_scalar_prefetch=0,
            grid=grid,
            in_specs=[
                pl.BlockSpec((1, tq, D), lambda b, qi, ki: (b, qi, 0)),  # q
                pl.BlockSpec((1, tk, D), lambda b, qi, ki: (b, ki, 0)),  # k
                pl.BlockSpec((1, tk, D), lambda b, qi, ki: (b, ki, 0)),  # v
            ],
            out_specs=pl.BlockSpec((1, tq, D), lambda b, qi, ki: (b, qi, 0)),
            scratch_shapes=[
                pltpu.VMEM((1, tq, 1), jnp.float32),  # running max m
                pltpu.VMEM((1, tq, 1), jnp.float32),  # running denom l
                pltpu.VMEM((1, tq, D), jnp.float32),  # output accumulator
            ],
        ),
        compiler_params=pltpu.CompilerParams(
            dimension_semantics=("parallel", "parallel", "arbitrary"),
        ),
    )(q, k, v)


# ----------------------------------------------------------------------------
# Linear projection kernel: y = x @ W + b  (W: (Din, Dout), resident in VMEM).
# ----------------------------------------------------------------------------
def _linear_kernel(x_ref, w_ref, b_ref, o_ref):
    o_ref[...] = (
        jnp.dot(x_ref[...], w_ref[...], preferred_element_type=jnp.float32)
        + b_ref[...]
    ).astype(o_ref.dtype)


def linear(x, w, b, *, tile_rows: int = 512):
    """x: (..., Din), w: (Din, Dout), b: (Dout,) -> (..., Dout)."""
    orig = x.shape
    din = orig[-1]
    dout = w.shape[1]
    rows = math.prod(orig[:-1])
    x2d = x.reshape(rows, din)
    tr = _pick_tile(rows, tile_rows)

    out2d = pl.pallas_call(
        _linear_kernel,
        out_shape=jax.ShapeDtypeStruct((rows, dout), x.dtype),
        grid_spec=pltpu.PrefetchScalarGridSpec(
            num_scalar_prefetch=0,
            grid=(rows // tr,),
            in_specs=[
                pl.BlockSpec((tr, din), lambda i: (i, 0)),     # x row-tile
                pl.BlockSpec((din, dout), lambda i: (0, 0)),   # W (resident)
                pl.BlockSpec((1, dout), lambda i: (0, 0)),     # b (resident)
            ],
            out_specs=pl.BlockSpec((tr, dout), lambda i: (i, 0)),
        ),
        compiler_params=pltpu.CompilerParams(
            dimension_semantics=("parallel",),
        ),
    )(x2d, w.astype(x.dtype), b.reshape(1, dout).astype(x.dtype))
    return out2d.reshape(orig[:-1] + (dout,))


# ----------------------------------------------------------------------------
# Full module forward.
# ----------------------------------------------------------------------------
def cross_attention(query, key, params=None, *, fft: bool = False):
    value = key  # torch: value = key, captured BEFORE the key projection
    if fft:
        # TODO(synk): torch.fft.fft has no Pallas TPU equivalent; the real-FFT
        # over the sequence dim is computed with XLA's FFT op outside the kernel.
        query = jnp.real(jnp.fft.fft(query, axis=1)).astype(query.dtype)
        query = linear(query, params["wq"], params["bq"])
        key = linear(key, params["wk"], params["bk"])
    return flash_cross_attention(query, key, value)


# ----------------------------------------------------------------------------
# Pure-JAX reference (mirrors the torch forward exactly).
# ----------------------------------------------------------------------------
def _ref_cross_attention(query, key, params=None, *, fft: bool = False):
    value = key
    if fft:
        query = jnp.real(jnp.fft.fft(query, axis=1))
        query = query @ params["wq"] + params["bq"]
        key = key @ params["wk"] + params["bk"]
    scores = jnp.einsum("bqd,bkd->bqk", query, key) / (query.shape[-1] ** 0.5)
    probs = jax.nn.softmax(scores, axis=-1)
    return jnp.einsum("bqk,bkd->bqd", probs, value)


if __name__ == "__main__":
    B, Nq, Nk, D = 2, 8, 16, 32

    root = jax.random.PRNGKey(0)
    kq, kk, k1, k2, k3, k4 = jax.random.split(root, 6)

    query = jax.random.normal(kq, (B, Nq, D), dtype=jnp.float32)
    key = jax.random.normal(kk, (B, Nk, D), dtype=jnp.float32)

    params = {
        "wq": 0.1 * jax.random.normal(k1, (D, D), dtype=jnp.float32),
        "bq": 0.1 * jax.random.normal(k2, (D,), dtype=jnp.float32),
        "wk": 0.1 * jax.random.normal(k3, (D, D), dtype=jnp.float32),
        "bk": 0.1 * jax.random.normal(k4, (D,), dtype=jnp.float32),
    }

    # Tolerance is loose because TPU f32 matmuls (both in the kernel and in the
    # XLA reference) use MXU bf16-pass precision by default.
    TOL = dict(atol=2e-2, rtol=2e-2)

    # fft=False path: pure cross-attention, value == key.
    out0 = jax.block_until_ready(cross_attention(query, key, fft=False))
    ref0 = _ref_cross_attention(query, key, fft=False)
    assert out0.shape == (B, Nq, D)
    assert jnp.allclose(out0, ref0, **TOL), "fft=False mismatch vs reference"

    # fft=True path: FFT(real) + query/key linear projections + attention.
    out1 = jax.block_until_ready(cross_attention(query, key, params, fft=True))
    ref1 = _ref_cross_attention(query, key, params, fft=True)
    assert out1.shape == (B, Nq, D)
    assert jnp.allclose(out1, ref1, **TOL), "fft=True mismatch vs reference"

    print("KERNEL_OK")
</pallas_src>

<mosaic_0001>
module attributes {stable_mosaic.version = 11 : i64} {
  func.func @_flash_cross_attn_kernel(%arg0: i32, %arg1: i32, %arg2: i32, %arg3: memref<1x8x32xf32, #tpu.memory_space<vmem>>, %arg4: memref<1x16x32xf32, #tpu.memory_space<vmem>>, %arg5: memref<1x16x32xf32, #tpu.memory_space<vmem>>, %arg6: memref<1x8x32xf32, #tpu.memory_space<vmem>>, %arg7: memref<1x8x1xf32, #tpu.memory_space<vmem>>, %arg8: memref<1x8x1xf32, #tpu.memory_space<vmem>>, %arg9: memref<1x8x32xf32, #tpu.memory_space<vmem>>) attributes {dimension_semantics = [#tpu.dimension_semantics<parallel>, #tpu.dimension_semantics<parallel>, #tpu.dimension_semantics<arbitrary>], iteration_bounds = array<i64: 2, 1, 1>, scalar_prefetch = 0 : i64, scratch_operands = 3 : i64, tpu.core_type = #tpu.core_type<tc>, window_params = [{transform_indices = @transform_0, window_bounds = array<i64: 1, 8, 32>}, {transform_indices = @transform_1, window_bounds = array<i64: 1, 16, 32>}, {transform_indices = @transform_2, window_bounds = array<i64: 1, 16, 32>}, {transform_indices = @transform_3, window_bounds = array<i64: 1, 8, 32>}]} {
    %c0_i32 = arith.constant 0 : i32
    %0 = arith.cmpi eq, %arg2, %c0_i32 : i32
    %1 = arith.extui %0 : i1 to i32
    %c0_i32_0 = arith.constant 0 : i32
    %2 = arith.cmpi ne, %1, %c0_i32_0 : i32
    scf.if %2 {
      %cst_33 = arith.constant 0xFF800000 : f32
      %34 = vector.broadcast %cst_33 : f32 to vector<1x8x1xf32>
      %c0_34 = arith.constant 0 : index
      %c0_35 = arith.constant 0 : index
      %c0_36 = arith.constant 0 : index
      %35 = vector.load %arg7[%c0_34, %c0_35, %c0_36] : memref<1x8x1xf32, #tpu.memory_space<vmem>>, vector<1x8x1xf32>
      tpu.vector_store %arg7[%c0_34, %c0_35, %c0_36], %34 {strides = array<i32>} : memref<1x8x1xf32, #tpu.memory_space<vmem>>, vector<1x8x1xf32>,
      %cst_37 = arith.constant 0.000000e+00 : f32
      %36 = vector.broadcast %cst_37 : f32 to vector<1x8x1xf32>
      %c0_38 = arith.constant 0 : index
      %c0_39 = arith.constant 0 : index
      %c0_40 = arith.constant 0 : index
      %37 = vector.load %arg8[%c0_38, %c0_39, %c0_40] : memref<1x8x1xf32, #tpu.memory_space<vmem>>, vector<1x8x1xf32>
      tpu.vector_store %arg8[%c0_38, %c0_39, %c0_40], %36 {strides = array<i32>} : memref<1x8x1xf32, #tpu.memory_space<vmem>>, vector<1x8x1xf32>,
      %cst_41 = arith.constant 0.000000e+00 : f32
      %38 = vector.broadcast %cst_41 : f32 to vector<1x8x32xf32>
      %c0_42 = arith.constant 0 : index
      %c0_43 = arith.constant 0 : index
      %c0_44 = arith.constant 0 : index
      %39 = vector.load %arg9[%c0_42, %c0_43, %c0_44] : memref<1x8x32xf32, #tpu.memory_space<vmem>>, vector<1x8x32xf32>
      tpu.vector_store %arg9[%c0_42, %c0_43, %c0_44], %38 {strides = array<i32>} : memref<1x8x32xf32, #tpu.memory_space<vmem>>, vector<1x8x32xf32>,
    } else {
    }
    %c0 = arith.constant 0 : index
    %c0_1 = arith.constant 0 : index
    %c0_2 = arith.constant 0 : index
    %3 = vector.load %arg3[%c0, %c0_1, %c0_2] : memref<1x8x32xf32, #tpu.memory_space<vmem>>, vector<1x8x32xf32>
    %c0_3 = arith.constant 0 : index
    %c0_4 = arith.constant 0 : index
    %c0_5 = arith.constant 0 : index
    %4 = vector.load %arg4[%c0_3, %c0_4, %c0_5] : memref<1x16x32xf32, #tpu.memory_space<vmem>>, vector<1x16x32xf32>
    "tpu.trace_start"() <{level = 10 : i32, message = "bqd,bkd->bqk"}> : () -> ()
    %cst = arith.constant dense<0.000000e+00> : vector<1x8x16xf32>
    %5 = tpu.matmul %3, %4, %cst {dimension_numbers = #tpu.dot_dimension_numbers<[2], [2], [1], [1], [0, 0, 0, 1, 1, 1], [0], [0]>} : vector<1x8x32xf32>, vector<1x16x32xf32>, vector<1x8x16xf32> -> vector<1x8x16xf32>
    "tpu.trace_stop"() : () -> ()
    %cst_6 = arith.constant 0.176776692 : f32
    %6 = vector.broadcast %cst_6 : f32 to vector<1x8x16xf32>
    %7 = arith.mulf %5, %6 : vector<1x8x16xf32>
    %c0_7 = arith.constant 0 : index
    %c0_8 = arith.constant 0 : index
    %c0_9 = arith.constant 0 : index
    %8 = vector.load %arg7[%c0_7, %c0_8, %c0_9] : memref<1x8x1xf32, #tpu.memory_space<vmem>>, vector<1x8x1xf32>
    %cst_10 = arith.constant dense<0xFF800000> : vector<1x8xf32>
    %9 = vector.multi_reduction <maximumf>, %7, %cst_10 [2] : vector<1x8x16xf32> to vector<1x8xf32>
    %10 = vector.shape_cast %9 : vector<1x8xf32> to vector<1x8x1xf32>
    %11 = arith.maximumf %8, %10 : vector<1x8x1xf32>
    %12 = arith.subf %8, %11 : vector<1x8x1xf32>
    %13 = math.exp %12 : vector<1x8x1xf32>
    %14 = vector.broadcast %11 : vector<1x8x1xf32> to vector<1x8x16xf32>
    %15 = arith.subf %7, %14 : vector<1x8x16xf32>
    %16 = math.exp %15 : vector<1x8x16xf32>
    %c0_11 = arith.constant 0 : index
    %c0_12 = arith.constant 0 : index
    %c0_13 = arith.constant 0 : index
    %17 = vector.load %arg8[%c0_11, %c0_12, %c0_13] : memref<1x8x1xf32, #tpu.memory_space<vmem>>, vector<1x8x1xf32>
    %18 = arith.mulf %13, %17 : vector<1x8x1xf32>
    %cst_14 = arith.constant dense<0.000000e+00> : vector<1x8xf32>
    %19 = vector.multi_reduction <add>, %16, %cst_14 [2] : vector<1x8x16xf32> to vector<1x8xf32>
    %20 = vector.shape_cast %19 : vector<1x8xf32> to vector<1x8x1xf32>
    %21 = arith.addf %18, %20 : vector<1x8x1xf32>
    %c0_15 = arith.constant 0 : index
    %c0_16 = arith.constant 0 : index
    %c0_17 = arith.constant 0 : index
    %22 = vector.load %arg8[%c0_15, %c0_16, %c0_17] : memref<1x8x1xf32, #tpu.memory_space<vmem>>, vector<1x8x1xf32>
    tpu.vector_store %arg8[%c0_15, %c0_16, %c0_17], %21 {strides = array<i32>} : memref<1x8x1xf32, #tpu.memory_space<vmem>>, vector<1x8x1xf32>,
    %c0_18 = arith.constant 0 : index
    %c0_19 = arith.constant 0 : index
    %c0_20 = arith.constant 0 : index
    %23 = vector.load %arg9[%c0_18, %c0_19, %c0_20] : memref<1x8x32xf32, #tpu.memory_space<vmem>>, vector<1x8x32xf32>
    %24 = vector.broadcast %13 : vector<1x8x1xf32> to vector<1x8x32xf32>
    %25 = arith.mulf %24, %23 : vector<1x8x32xf32>
    %c0_21 = arith.constant 0 : index
    %c0_22 = arith.constant 0 : index
    %c0_23 = arith.constant 0 : index
    %26 = vector.load %arg5[%c0_21, %c0_22, %c0_23] : memref<1x16x32xf32, #tpu.memory_space<vmem>>, vector<1x16x32xf32>
    "tpu.trace_start"() <{level = 10 : i32, message = "bqk,bkd->bqd"}> : () -> ()
    %cst_24 = arith.constant dense<0.000000e+00> : vector<1x8x32xf32>
    %27 = tpu.matmul %16, %26, %cst_24 {dimension_numbers = #tpu.dot_dimension_numbers<[2], [1], [1], [2], [0, 0, 0, 1, 1, 2], [0], [0]>} : vector<1x8x16xf32>, vector<1x16x32xf32>, vector<1x8x32xf32> -> vector<1x8x32xf32>
    "tpu.trace_stop"() : () -> ()
    %28 = arith.addf %25, %27 : vector<1x8x32xf32>
    %c0_25 = arith.constant 0 : index
    %c0_26 = arith.constant 0 : index
    %c0_27 = arith.constant 0 : index
    %29 = vector.load %arg9[%c0_25, %c0_26, %c0_27] : memref<1x8x32xf32, #tpu.memory_space<vmem>>, vector<1x8x32xf32>
    tpu.vector_store %arg9[%c0_25, %c0_26, %c0_27], %28 {strides = array<i32>} : memref<1x8x32xf32, #tpu.memory_space<vmem>>, vector<1x8x32xf32>,
    %c0_28 = arith.constant 0 : index
    %c0_29 = arith.constant 0 : index
    %c0_30 = arith.constant 0 : index
    %30 = vector.load %arg7[%c0_28, %c0_29, %c0_30] : memref<1x8x1xf32, #tpu.memory_space<vmem>>, vector<1x8x1xf32>
    tpu.vector_store %arg7[%c0_28, %c0_29, %c0_30], %11 {strides = array<i32>} : memref<1x8x1xf32, #tpu.memory_space<vmem>>, vector<1x8x1xf32>,
    %c0_i32_31 = arith.constant 0 : i32
    %31 = arith.cmpi eq, %arg2, %c0_i32_31 : i32
    %32 = arith.extui %31 : i1 to i32
    %c0_i32_32 = arith.constant 0 : i32
    %33 = arith.cmpi ne, %32, %c0_i32_32 : i32
    scf.if %33 {
      %c0_33 = arith.constant 0 : index
      %c0_34 = arith.constant 0 : index
      %c0_35 = arith.constant 0 : index
      %34 = vector.load %arg9[%c0_33, %c0_34, %c0_35] : memref<1x8x32xf32, #tpu.memory_space<vmem>>, vector<1x8x32xf32>
      %c0_36 = arith.constant 0 : index
      %c0_37 = arith.constant 0 : index
      %c0_38 = arith.constant 0 : index
      %35 = vector.load %arg8[%c0_36, %c0_37, %c0_38] : memref<1x8x1xf32, #tpu.memory_space<vmem>>, vector<1x8x1xf32>
      %36 = vector.broadcast %35 : vector<1x8x1xf32> to vector<1x8x32xf32>
      %37 = arith.divf %34, %36 : vector<1x8x32xf32>
      %c0_39 = arith.constant 0 : index
      %c0_40 = arith.constant 0 : index
      %c0_41 = arith.constant 0 : index
      %38 = vector.load %arg6[%c0_39, %c0_40, %c0_41] : memref<1x8x32xf32, #tpu.memory_space<vmem>>, vector<1x8x32xf32>
      tpu.vector_store %arg6[%c0_39, %c0_40, %c0_41], %37 {strides = array<i32>} : memref<1x8x32xf32, #tpu.memory_space<vmem>>, vector<1x8x32xf32>,
    } else {
    }
    return
  }
  func.func @transform_0(%arg0: i32, %arg1: i32, %arg2: i32) -> (i32, i32, i32) {
    %c0_i32 = arith.constant 0 : i32
    %c0_i32_0 = arith.constant 0 : i32
    return %arg0, %arg1, %c0_i32 : i32, i32, i32
  }
  func.func @transform_1(%arg0: i32, %arg1: i32, %arg2: i32) -> (i32, i32, i32) {
    %c0_i32 = arith.constant 0 : i32
    %c0_i32_0 = arith.constant 0 : i32
    return %arg0, %arg2, %c0_i32 : i32, i32, i32
  }
  func.func @transform_2(%arg0: i32, %arg1: i32, %arg2: i32) -> (i32, i32, i32) {
    %c0_i32 = arith.constant 0 : i32
    %c0_i32_0 = arith.constant 0 : i32
    return %arg0, %arg2, %c0_i32 : i32, i32, i32
  }
  func.func @transform_3(%arg0: i32, %arg1: i32, %arg2: i32) -> (i32, i32, i32) {
    %c0_i32 = arith.constant 0 : i32
    %c0_i32_0 = arith.constant 0 : i32
    return %arg0, %arg1, %c0_i32 : i32, i32, i32
  }
}

</mosaic_0001>

<llo_original>
// kernel: tpu_custom_call.1
$region0: #{tpu_custom_call.1}
  #allocation0 [shape = 'u32[]', space=smem, size = 0x4, offset = 0x4, fixed_abs, tag = 'smem constant byte address 0x4 - core index']
  #allocation1 [shape = 'u32[144,128]{1,0:T(1,128)}', space=vmem, size = 0x12000, scoped, tag = 'internal scratch']
  #allocation2 [shape = 'f32[1,8,1]{2,1,0:T(8,128)}', space=vmem, size = 0x1000, scoped, tag = 'scratch operand']
  #allocation3 [shape = 'f32[1,8,1]{2,1,0:T(8,128)}', space=vmem, size = 0x1000, scoped, tag = 'scratch operand']
  #allocation4 [shape = 'f32[1,8,32]{2,1,0:T(8,128)}', space=vmem, size = 0x1000, scoped, tag = 'scratch operand']
  %s0 = inlined_call_operand.hbm [shape: f32[2,8,32], index: 0, kind: input, shape index: {}]
  %s1 = inlined_call_operand.hbm [shape: f32[2,16,32], index: 1, kind: input, shape index: {}]
  %s2 = inlined_call_operand.hbm [shape: f32[2,16,32], index: 2, kind: input, shape index: {}]
  %s3 = inlined_call_operand.hbm [shape: f32[2,8,32], index: 3, kind: output, shape index: {}]
  %s4 = sld [smem:[#allocation0]]
  $region65: #{tpu_custom_call.1} parent=0
    _
  %s6 = ssub.s32 1, %s4
  %s7 = scalar_select 0, %s6, %s4
  $region1: #{tpu_custom_call.1} parent=0
    #allocation5 [shape = 'u8[8192]{0}', space=vmem, size = 0x2000, scoped, tag = 'input window, operand 0']
    #allocation6 [shape = 's32[2]{0}', space=sflag, size = 0x8, scoped, tag = 'scoped memory for tpu_custom_call.1']
    #allocation7 [shape = 's32[2]{0}', space=sflag, size = 0x8, scoped, tag = 'scoped memory for tpu_custom_call.1']
    #allocation8 [shape = 'u8[16384]{0}', space=vmem, size = 0x4000, scoped, tag = 'input window, operand 1']
    #allocation9 [shape = 's32[2]{0}', space=sflag, size = 0x8, scoped, tag = 'scoped memory for tpu_custom_call.1']
    #allocation10 [shape = 'u8[16384]{0}', space=vmem, size = 0x4000, scoped, tag = 'input window, operand 2']
    #allocation11 [shape = 'u8[8192]{0}', space=vmem, size = 0x2000, scoped, tag = 'output window, operand 0']
    %8 = vsyncpa [#allocation6], 0
    %s9 = scalar_lea.sflag [#allocation6], 1
    %10 = vsyncpa %s9, 0
    %11 = vsyncpa [#allocation9], 0
    %s12 = scalar_lea.sflag [#allocation9], 1
    %13 = vsyncpa %s12, 0
    %14 = vsyncpa [#allocation7], 0
    %s15 = scalar_lea.sflag [#allocation7], 1
    %16 = vsyncpa %s15, 0
    loop: start=0, step=1, limit=4
    $region2: #{tpu_custom_call.1} parent=1 // loop_pre_header
      _
    $region3: #{tpu_custom_call.1} parent=1 // loop_header
      %s18 = sphi 0, %s22
      %p19 = scmp.ge.s32.totalorder %s18, 4
      %s25 = sphi 0, %s44
      %s26 = sphi 0, %s40
      %s27 = sphi 0, %s36
      %s28 = sphi 0, %s25
      %s29 = sphi 0, %s26
      %s30 = sphi 0, %s27
      %s31 = sphi 0, %s28
      %s32 = sphi 0, %s29
      %s33 = sphi 0, %s30
      %s49 = sphi 0, %s51
      %s52 = sphi 0, %s49
      %s53 = sphi 0, %s52
      %s69 = sphi 0, %s53
      %s77 = sphi 0, %s79
      %s80 = sphi 0, %s77
      %s81 = sphi 0, %s80
      %s97 = sphi 0, %s81
      %s105 = sphi 0, %s107
      %s108 = sphi 0, %s105
      %s109 = sphi 0, %s108
      %s125 = sphi 0, %s109
      %s133 = sphi 0, %s135
      %s136 = sphi 0, %s133
      %s137 = sphi 0, %s136
      %s153 = sphi 0, %s137
    $region4: #{tpu_custom_call.1} parent=1 // loop_header_branch
      %21 = sbr.rel (%p19) target = $region8
    $region5: #{tpu_custom_call.1} parent=1 // loop_body
      %s23 = ssub.s32 %s18, 1
      %s24 = ssub.s32 %s18, 2
      %s34 = sadd.s32 1, %s27
      %p35 = scmp.ge.s32.totalorder %s34, 1
      %s36 = scalar_select %p35, 0, %s34
      %s37 = sadd.s32 1, %s26
      %s38 = scalar_select %p35, %s37, %s26
      %p39 = scmp.ge.s32.totalorder %s38, 1
      %s40 = scalar_select %p39, 0, %s38
      %s41 = sadd.s32 1, %s25
      %s42 = scalar_select %p39, %s41, %s25
      %p43 = scmp.ge.s32.totalorder %s42, 2
      %s44 = scalar_select %p43, 0, %s42
      %s45 = ssub.s32 %s25, %s44
      %s46 = ssub.s32 %s26, %s40
      %s47 = sor.u32 %s45, %s46
      %p48 = scmp.eq.s32.totalorder %s47, 0
      %s50 = sadd.s32 %s49, 1
      %s51 = scalar_select %p48, %s49, %s50
      %p54 = pneg %p48
      %p55 = scmp.eq.s32.totalorder %s18, 1
      %p56 = por %p54, %p55
      %p57 = scmp.ne.s32.totalorder %s49, %s52
      %p58 = scmp.eq.s32.totalorder %s18, 0
      %p59 = por %p57, %p58
      %p60 = scmp.ne.s32.totalorder %s49, %s52
      %p61 = scmp.eq.s32.totalorder %s23, 1
      %p62 = por %p60, %p61
      %p63 = scmp.ne.s32.totalorder %s52, %s53
      %p64 = scmp.eq.s32.totalorder %s23, 0
      %p65 = por %p63, %p64
      %p66 = scmp.ne.s32.totalorder %s52, %s53
      %p67 = scmp.eq.s32.totalorder %s24, 1
      %p68 = por %p66, %p67
      %p70 = scmp.ne.s32.totalorder %s53, %s69
      %p71 = scmp.eq.s32.totalorder %s24, 0
      %p72 = por %p70, %p71
      %s73 = ssub.s32 %s25, %s44
      %s74 = ssub.s32 %s27, %s36
      %s75 = sor.u32 %s73, %s74
      %p76 = scmp.eq.s32.totalorder %s75, 0
      %s78 = sadd.s32 %s77, 1
      %s79 = scalar_select %p76, %s77, %s78
      %p82 = pneg %p76
      %p83 = scmp.eq.s32.totalorder %s18, 1
      %p84 = por %p82, %p83
      %p85 = scmp.ne.s32.totalorder %s77, %s80
      %p86 = scmp.eq.s32.totalorder %s18, 0
      %p87 = por %p85, %p86
      %p88 = scmp.ne.s32.totalorder %s77, %s80
      %p89 = scmp.eq.s32.totalorder %s23, 1
      %p90 = por %p88, %p89
      %p91 = scmp.ne.s32.totalorder %s80, %s81
      %p92 = scmp.eq.s32.totalorder %s23, 0
      %p93 = por %p91, %p92
      %p94 = scmp.ne.s32.totalorder %s80, %s81
      %p95 = scmp.eq.s32.totalorder %s24, 1
      %p96 = por %p94, %p95
      %p98 = scmp.ne.s32.totalorder %s81, %s97
      %p99 = scmp.eq.s32.totalorder %s24, 0
      %p100 = por %p98, %p99
      %s101 = ssub.s32 %s25, %s44
      %s102 = ssub.s32 %s27, %s36
      %s103 = sor.u32 %s101, %s102
      %p104 = scmp.eq.s32.totalorder %s103, 0
      %s106 = sadd.s32 %s105, 1
      %s107 = scalar_select %p104, %s105, %s106
      %p110 = pneg %p104
      %p111 = scmp.eq.s32.totalorder %s18, 1
      %p112 = por %p110, %p111
      %p113 = scmp.ne.s32.totalorder %s105, %s108
      %p114 = scmp.eq.s32.totalorder %s18, 0
      %p115 = por %p113, %p114
      %p116 = scmp.ne.s32.totalorder %s105, %s108
      %p117 = scmp.eq.s32.totalorder %s23, 1
      %p118 = por %p116, %p117
      %p119 = scmp.ne.s32.totalorder %s108, %s109
      %p120 = scmp.eq.s32.totalorder %s23, 0
      %p121 = por %p119, %p120
      %p122 = scmp.ne.s32.totalorder %s108, %s109
      %p123 = scmp.eq.s32.totalorder %s24, 1
      %p124 = por %p122, %p123
      %p126 = scmp.ne.s32.totalorder %s109, %s125
      %p127 = scmp.eq.s32.totalorder %s24, 0
      %p128 = por %p126, %p127
      %s129 = ssub.s32 %s25, %s44
      %s130 = ssub.s32 %s26, %s40
      %s131 = sor.u32 %s129, %s130
      %p132 = scmp.eq.s32.totalorder %s131, 0
      %s134 = sadd.s32 %s133, 1
      %s135 = scalar_select %p132, %s133, %s134
      %p138 = pneg %p132
      %p139 = scmp.eq.s32.totalorder %s18, 1
      %p140 = por %p138, %p139
      %p141 = scmp.ne.s32.totalorder %s133, %s136
      %p142 = scmp.eq.s32.totalorder %s18, 0
      %p143 = por %p141, %p142
      %p144 = scmp.ne.s32.totalorder %s133, %s136
      %p145 = scmp.eq.s32.totalorder %s23, 1
      %p146 = por %p144, %p145
      %p147 = scmp.ne.s32.totalorder %s136, %s137
      %p148 = scmp.eq.s32.totalorder %s23, 0
      %p149 = por %p147, %p148
      %p150 = scmp.ne.s32.totalorder %s136, %s137
      %p151 = scmp.eq.s32.totalorder %s24, 1
      %p152 = por %p150, %p151
      %p154 = scmp.ne.s32.totalorder %s137, %s153
      %p155 = scmp.eq.s32.totalorder %s24, 0
      %p156 = por %p154, %p155
      %p157 = scmp.le.s32.totalorder 1, %s18
      %p158 = scmp.lt.s32.totalorder %s18, 3
      %p159 = pnand %p157, %p158
      %p160 = pneg %p159
      // Predicated region
      $region9: #{tpu_custom_call.1} parent=5 // pred_check
        _
      $region10: #{tpu_custom_call.1} parent=5 // pred_check_branch
        %162 = sbr.rel (%p159) target = $region12
      $region11: #{tpu_custom_call.1} parent=5 // pred_region
        %s163 = ssub.s32 %s18, 1
      $region12: #{tpu_custom_call.1} parent=5 // pred_fallthru
        _
      %p164 = scmp.lt.s32.totalorder %s18, 2
      // Predicated region
      $region13: #{tpu_custom_call.1} parent=5 // pred_check
        %p165 = pneg %p164
      $region14: #{tpu_custom_call.1} parent=5 // pred_check_branch
        %167 = sbr.rel (%p165) target = $region16
      $region15: #{tpu_custom_call.1} parent=5 // pred_region
        // Predicated region
        $region17: #{tpu_custom_call.1} parent=15 // pred_check
          %p168 = pneg %p59
        $region18: #{tpu_custom_call.1} parent=15 // pred_check_branch
          %170 = sbr.rel (%p168) target = $region20
        $region19: #{tpu_custom_call.1} parent=15 // pred_region
          %s171 = sand.u32 %s49, 1
          %s172 = scalar_lea.sflag [#allocation6], %s171
          %s173 = sand.u32 %s49, 1
          %s174 = smul.addr %s173, 8
          %s175 = scalar_lea.vmem [#allocation5], %s174
          %s177 = ssub.s32 128, 128
          %178 = vsyncadd %s172, %s177
          %s179 = sadd.s32 %s26, %s25
          %s180 = smul.addr %s179, 128
          %s181 = scalar_lea.hbm %s0, %s180
          %s183 = sshll.u32 %s175, 4
          %s184 = int_to_ptr.vmem [resolvable:$true] %s183
          %186 = dma.hbm_to_vmem [thread:$0]  %s181, 128, %s184, %s172
        $region20: #{tpu_custom_call.1} parent=15 // pred_fallthru
          _
        // Predicated region
        $region21: #{tpu_custom_call.1} parent=15 // pred_check
          %p187 = pneg %p87
        $region22: #{tpu_custom_call.1} parent=15 // pred_check_branch
          %189 = sbr.rel (%p187) target = $region24
        $region23: #{tpu_custom_call.1} parent=15 // pred_region
          %s190 = sand.u32 %s18, 1
          %s191 = scalar_lea.sflag [#allocation9], %s190
          %s192 = sand.u32 %s77, 1
          %s193 = smul.addr %s192, 16
          %s194 = scalar_lea.vmem [#allocation8], %s193
          %s195 = smul.u32 2, %s27
          %s197 = ssub.s32 256, 256
          %198 = vsyncadd %s191, %s197
          %s199 = smul.addr %s25, 2
          %s200 = sadd.s32 %s195, %s199
          %s201 = smul.addr %s200, 128
          %s202 = scalar_lea.hbm %s1, %s201
          %s203 = sshll.u32 %s194, 4
          %s204 = int_to_ptr.vmem [resolvable:$true] %s203
          %209 = dma.hbm_to_vmem [thread:$0]  %s202, 256, %s204, %s191, 128, 128, 8
        $region24: #{tpu_custom_call.1} parent=15 // pred_fallthru
          _
        // Predicated region
        $region25: #{tpu_custom_call.1} parent=15 // pred_check
          %p210 = pneg %p115
        $region26: #{tpu_custom_call.1} parent=15 // pred_check_branch
          %212 = sbr.rel (%p210) target = $region28
        $region27: #{tpu_custom_call.1} parent=15 // pred_region
          %s213 = sand.u32 %s18, 1
          %s214 = scalar_lea.sflag [#allocation9], %s213
          %s215 = sand.u32 %s105, 1
          %s216 = smul.addr %s215, 16
          %s217 = scalar_lea.vmem [#allocation10], %s216
          %s218 = smul.u32 2, %s27
          %s220 = ssub.s32 256, 256
          %221 = vsyncadd %s214, %s220
          %s222 = smul.addr %s25, 2
          %s223 = sadd.s32 %s218, %s222
          %s224 = smul.addr %s223, 128
          %s225 = scalar_lea.hbm %s2, %s224
          %s226 = sshll.u32 %s217, 4
          %s227 = int_to_ptr.vmem [resolvable:$true] %s226
          %232 = dma.hbm_to_vmem [thread:$0]  %s225, 256, %s227, %s214, 128, 128, 8
        $region28: #{tpu_custom_call.1} parent=15 // pred_fallthru
          _
      $region16: #{tpu_custom_call.1} parent=5 // pred_fallthru
        _
      %p233 = scmp.le.s32.totalorder 1, %s18
      %p234 = scmp.lt.s32.totalorder %s18, 3
      %p235 = pnand %p233, %p234
      %p236 = pneg %p235
      // Predicated region
      $region29: #{tpu_custom_call.1} parent=5 // pred_check
        _
      $region30: #{tpu_custom_call.1} parent=5 // pred_check_branch
        %238 = sbr.rel (%p235) target = $region32
      $region31: #{tpu_custom_call.1} parent=5 // pred_region
        %s239 = ssub.s32 %s18, 1
        %s240 = sand.u32 %s52, 1
        %s241 = scalar_lea.sflag [#allocation6], %s240
        %s242 = sand.u32 %s52, 1
        %s243 = smul.addr %s242, 8
        %s244 = scalar_lea.vmem [#allocation5], %s243
        // Predicated region
        $region33: #{tpu_custom_call.1} parent=31 // pred_check
          %p245 = pneg %p65
        $region34: #{tpu_custom_call.1} parent=31 // pred_check_branch
          %247 = sbr.rel (%p245) target = $region36
        $region35: #{tpu_custom_call.1} parent=31 // pred_region
          %248 = dma.done %s241, 128
        $region36: #{tpu_custom_call.1} parent=31 // pred_fallthru
          _
        %s249 = sand.u32 %s23, 1
        %s250 = scalar_lea.sflag [#allocation9], %s249
        %s251 = sand.u32 %s80, 1
        %s252 = smul.addr %s251, 16
        %s253 = scalar_lea.vmem [#allocation8], %s252
        // Predicated region
        $region37: #{tpu_custom_call.1} parent=31 // pred_check
          %p254 = pneg %p93
        $region38: #{tpu_custom_call.1} parent=31 // pred_check_branch
          %256 = sbr.rel (%p254) target = $region40
        $region39: #{tpu_custom_call.1} parent=31 // pred_region
          %257 = dma.done %s250, 256
        $region40: #{tpu_custom_call.1} parent=31 // pred_fallthru
          _
        %s258 = sand.u32 %s23, 1
        %s259 = scalar_lea.sflag [#allocation9], %s258
        %s260 = sand.u32 %s108, 1
        %s261 = smul.addr %s260, 16
        %s262 = scalar_lea.vmem [#allocation10], %s261
        // Predicated region
        $region41: #{tpu_custom_call.1} parent=31 // pred_check
          %p263 = pneg %p121
        $region42: #{tpu_custom_call.1} parent=31 // pred_check_branch
          %265 = sbr.rel (%p263) target = $region44
        $region43: #{tpu_custom_call.1} parent=31 // pred_region
          %266 = dma.done %s259, 256
        $region44: #{tpu_custom_call.1} parent=31 // pred_fallthru
          _
        %s267 = sand.u32 %s52, 1
        %s268 = scalar_lea.sflag [#allocation6], %s267
        %s269 = sand.u32 %s52, 1
        %s270 = smul.addr %s269, 8
        %s271 = scalar_lea.vmem [#allocation5], %s270
        %p272 = pneg %p65
        %p273 = pneg %p62
        %s274 = sand.u32 %s23, 1
        %s275 = scalar_lea.sflag [#allocation9], %s274
        %s276 = sand.u32 %s80, 1
        %s277 = smul.addr %s276, 16
        %s278 = scalar_lea.vmem [#allocation8], %s277
        %p279 = pneg %p93
        %p280 = pneg %p90
        %s281 = sand.u32 %s23, 1
        %s282 = scalar_lea.sflag [#allocation9], %s281
        %s283 = sand.u32 %s108, 1
        %s284 = smul.addr %s283, 16
        %s285 = scalar_lea.vmem [#allocation10], %s284
        %p286 = pneg %p121
        %p287 = pneg %p118
        %p288 = pneg %p149
        %p289 = pneg %p146
        %s290 = sand.u32 %s136, 1
        %s291 = scalar_lea.sflag [#allocation7], %s290
        %s292 = sand.u32 %s136, 1
        %s293 = smul.addr %s292, 8
        %s294 = scalar_lea.vmem [#allocation11], %s293
        %s295 = smul.u32 2, %s30
        %s296 = smul.u32 2, %s30
        %p297 = scmp.eq.s32.totalorder %s30, 0
        // Predicated region
        $region45: #{tpu_custom_call.1} parent=31 // pred_check
          %p298 = pneg %p297
        $region46: #{tpu_custom_call.1} parent=31 // pred_check_branch
          %300 = sbr.rel (%p298) target = $region48
        $region47: #{tpu_custom_call.1} parent=31 // pred_region
          %vm301 = vcmask 7168
          %302 = vst.msk [vmem:[#allocation2] sm:$0xff] %vm301, -inf
          %303 = vst.msk [vmem:[#allocation3] sm:$0xff] %vm301, 0.0
          %vm304 = vcmask 261120
          %305 = vst.msk [vmem:[#allocation4] sm:$0xff] %vm304, 0.0
        $region48: #{tpu_custom_call.1} parent=31 // pred_fallthru
          _
        %v306 = vld [vmem:[%s244] sm:$0xff]
        %v307 = vld [vmem:[%s253] sm:$0xff]
        %v308 = vld [vmem:[%s253 + $0x8] sm:$0xff]
        %vm309 = vcmask 261120
        %v311 = vsel %vm309, %v306, 0
        %v314 = vsel %vm309, %v307, 0
        %v317 = vsel %vm309, %v308, 0
        %319 = vmatprep.subr.mxu0 0.0
        %320 = vmatpush1.xpose.msra.mxu0 %v314
        %321 = vmatprep.subr.mxu0 0.0
        %322 = vmatpush1.xpose.msra.mxu0 %v317
        %323 = vmatprep.subr.mxu0 0.0
        %324 = vmatpush1.xpose.msra.mxu0 0.0
        %325 = vmatprep.subr.mxu0 0.0
        %326 = vmatpush1.xpose.msra.mxu0 0.0
        %327 = vmatprep.subr.mxu0 0.0
        %328 = vmatpush1.xpose.msra.mxu0 0.0
        %329 = vmatprep.subr.mxu0 0.0
        %330 = vmatpush1.xpose.msra.mxu0 0.0
        %331 = vmatprep.subr.mxu0 0.0
        %332 = vmatpush1.xpose.msra.mxu0 0.0
        %333 = vmatprep.subr.mxu0 0.0
        %334 = vmatpush1.xpose.msra.mxu0 0.0
        %335 = vmatprep.subr.mxu0 0.0
        %336 = vmatpush1.xpose.msra.mxu0 0.0
        %337 = vmatprep.subr.mxu0 0.0
        %338 = vmatpush1.xpose.msra.mxu0 0.0
        %339 = vmatprep.subr.mxu0 0.0
        %340 = vmatpush1.xpose.msra.mxu0 0.0
        %341 = vmatprep.subr.mxu0 0.0
        %342 = vmatpush1.xpose.msra.mxu0 0.0
        %343 = vmatprep.subr.mxu0 0.0
        %344 = vmatpush1.xpose.msra.mxu0 0.0
        %345 = vmatprep.subr.mxu0 0.0
        %346 = vmatpush1.xpose.msra.mxu0 0.0
        %347 = vmatprep.subr.mxu0 0.0
        %348 = vmatpush1.xpose.msra.mxu0 0.0
        %349 = vmatprep.subr.mxu0 0.0
        %350 = vmatpush1.xpose.msra.mxu0 0.0
        %351 = vmatprep.subr.mxu0 0.0
        %352 = vmatpush1.xpose.msra.mxu0 0.0
        %353 = vmatprep.subr.mxu0 0.0
        %354 = vmatpush1.xpose.msra.mxu0 0.0
        %355 = vmatprep.subr.mxu0 0.0
        %356 = vmatpush1.xpose.msra.mxu0 0.0
        %357 = vmatprep.subr.mxu0 0.0
        %358 = vmatpush1.xpose.msra.mxu0 0.0
        %359 = vmatprep.subr.mxu0 0.0
        %360 = vmatpush1.xpose.msra.mxu0 0.0
        %361 = vmatprep.subr.mxu0 0.0
        %362 = vmatpush1.xpose.msra.mxu0 0.0
        %363 = vmatprep.subr.mxu0 0.0
        %364 = vmatpush1.xpose.msra.mxu0 0.0
        %365 = vmatprep.subr.mxu0 0.0
        %366 = vmatpush1.xpose.msra.mxu0 0.0
        %367 = vmatprep.subr.mxu0 0.0
        %368 = vmatpush1.xpose.msra.mxu0 0.0
        %369 = vmatprep.subr.mxu0 0.0
        %370 = vmatpush1.xpose.msra.mxu0 0.0
        %371 = vmatprep.subr.mxu0 0.0
        %372 = vmatpush1.xpose.msra.mxu0 0.0
        %373 = vmatprep.subr.mxu0 0.0
        %374 = vmatpush1.xpose.msra.mxu0 0.0
        %375 = vmatprep.subr.mxu0 0.0
        %376 = vmatpush1.xpose.msra.mxu0 0.0
        %377 = vmatprep.subr.mxu0 0.0
        %378 = vmatpush1.xpose.msra.mxu0 0.0
        %379 = vmatprep.subr.mxu0 0.0
        %380 = vmatpush1.xpose.msra.mxu0 0.0
        %381 = vmatprep.subr.mxu0 0.0
        %382 = vmatpush1.xpose.msra.mxu0 0.0
        %383 = vmatprep.mubr.f32.mxu0 0.0
        %384 = vmatmul.mubr.f32.gmra.mrb[0].mxu0 %v311
        %v385 = vpop.f32.mrb[0].mxu0
        %v386 = vadd.f32 0.0, %v385
        %v387 = vpop.f32.mrb[0].mxu0
        %388 = vdwg.mxu0
        %v389 = vmul.f32 %v386, 0.17677669
        %v390 = vld [vmem:[#allocation2] sm:$0xff]
        %vm391 = vcmask 130048
        %v392 = vsel %vm391, %v389, -inf
        %393 = vmax.xlane.f32.xlu0 %v392
        %v394 = vpop.xlane.xlu0 %393
        %v395 = vmax.f32 %v390, %v394
        %v396 = vsub.f32 %v390, %v395
        %v397 = vmul.f32 %v396, 1.442695
        %v398 = vpow.pop %v397
        %400 = vset.pattern.permute.xlu0 0
        %401 = vperm.xlu0 %400, %v395
        %v402 = vpop.permute.xlu0 %401
        %v404 = vsub.f32 %v389, %v402
        %v405 = vmul.f32 %v404, 1.442695
        %v406 = vpow.pop %v405
        %v407 = vld [vmem:[#allocation3] sm:$0xff]
        %v408 = vmul.f32 %v398, %v407
        %v409 = vsel %vm391, %v406, 0.0
        %410 = vadd.xlane.f32.xlu0 %v409
        %v411 = vpop.xlane.xlu0 %410
        %v412 = vadd.f32 %v408, %v411
        %vm413 = vcmask 7168
        %414 = vst.msk [vmem:[#allocation3] sm:$0xff] %vm413, %v412
        %v415 = vld [vmem:[#allocation4] sm:$0xff]
        %417 = vset.pattern.permute.xlu0 0
        %418 = vperm.xlu0 %417, %v398
        %v419 = vpop.permute.xlu0 %418
        %v421 = vmul.f32 %v419, %v415
        %v422 = vld [vmem:[%s262] sm:$0xff]
        %v423 = vld [vmem:[%s262 + $0x8] sm:$0xff]
        %v425 = vsel %vm391, %v406, 0
        %427 = vmatprep.subr.mxu0 0.0
        %428 = vmatpush1.msra.mxu0 %v422
        %429 = vmatprep.subr.mxu0 0.0
        %430 = vmatpush1.msra.mxu0 %v423
        %431 = vmatprep.subr.mxu0 0.0
        %432 = vmatpush1.msra.mxu0 0.0
        %433 = vmatprep.subr.mxu0 0.0
        %434 = vmatpush1.msra.mxu0 0.0
        %435 = vmatprep.subr.mxu0 0.0
        %436 = vmatpush1.msra.mxu0 0.0
        %437 = vmatprep.subr.mxu0 0.0
        %438 = vmatpush1.msra.mxu0 0.0
        %439 = vmatprep.subr.mxu0 0.0
        %440 = vmatpush1.msra.mxu0 0.0
        %441 = vmatprep.subr.mxu0 0.0
        %442 = vmatpush1.msra.mxu0 0.0
        %443 = vmatprep.subr.mxu0 0.0
        %444 = vmatpush1.msra.mxu0 0.0
        %445 = vmatprep.subr.mxu0 0.0
        %446 = vmatpush1.msra.mxu0 0.0
        %447 = vmatprep.subr.mxu0 0.0
        %448 = vmatpush1.msra.mxu0 0.0
        %449 = vmatprep.subr.mxu0 0.0
        %450 = vmatpush1.msra.mxu0 0.0
        %451 = vmatprep.subr.mxu0 0.0
        %452 = vmatpush1.msra.mxu0 0.0
        %453 = vmatprep.subr.mxu0 0.0
        %454 = vmatpush1.msra.mxu0 0.0
        %455 = vmatprep.subr.mxu0 0.0
        %456 = vmatpush1.msra.mxu0 0.0
        %457 = vmatprep.subr.mxu0 0.0
        %458 = vmatpush1.msra.mxu0 0.0
        %459 = vmatprep.subr.mxu0 0.0
        %460 = vmatpush1.msra.mxu0 0.0
        %461 = vmatprep.subr.mxu0 0.0
        %462 = vmatpush1.msra.mxu0 0.0
        %463 = vmatprep.subr.mxu0 0.0
        %464 = vmatpush1.msra.mxu0 0.0
        %465 = vmatprep.subr.mxu0 0.0
        %466 = vmatpush1.msra.mxu0 0.0
        %467 = vmatprep.subr.mxu0 0.0
        %468 = vmatpush1.msra.mxu0 0.0
        %469 = vmatprep.subr.mxu0 0.0
        %470 = vmatpush1.msra.mxu0 0.0
        %471 = vmatprep.subr.mxu0 0.0
        %472 = vmatpush1.msra.mxu0 0.0
        %473 = vmatprep.subr.mxu0 0.0
        %474 = vmatpush1.msra.mxu0 0.0
        %475 = vmatprep.subr.mxu0 0.0
        %476 = vmatpush1.msra.mxu0 0.0
        %477 = vmatprep.subr.mxu0 0.0
        %478 = vmatpush1.msra.mxu0 0.0
        %479 = vmatprep.subr.mxu0 0.0
        %480 = vmatpush1.msra.mxu0 0.0
        %481 = vmatprep.subr.mxu0 0.0
        %482 = vmatpush1.msra.mxu0 0.0
        %483 = vmatprep.subr.mxu0 0.0
        %484 = vmatpush1.msra.mxu0 0.0
        %485 = vmatprep.subr.mxu0 0.0
        %486 = vmatpush1.msra.mxu0 0.0
        %487 = vmatprep.subr.mxu0 0.0
        %488 = vmatpush1.msra.mxu0 0.0
        %489 = vmatprep.subr.mxu0 0.0
        %490 = vmatpush1.msra.mxu0 0.0
        %491 = vmatprep.mubr.f32.mxu0 0.0
        %492 = vmatmul.mubr.f32.gmra.mrb[0].mxu0 %v425
        %v493 = vpop.f32.mrb[0].mxu0
        %v494 = vadd.f32 0.0, %v493
        %v495 = vpop.f32.mrb[0].mxu0
        %496 = vdwg.mxu0
        %v497 = vadd.f32 %v421, %v494
        %498 = vst.msk [vmem:[#allocation4] sm:$0xff] %vm309, %v497
        %499 = vst.msk [vmem:[#allocation2] sm:$0xff] %vm413, %v395
        // Predicated region
        $region49: #{tpu_custom_call.1} parent=31 // pred_check
          %p500 = pneg %p297
        $region50: #{tpu_custom_call.1} parent=31 // pred_check_branch
          %502 = sbr.rel (%p500) target = $region52
        $region51: #{tpu_custom_call.1} parent=31 // pred_region
          %v503 = vld [vmem:[#allocation4] sm:$0xff]
          %v504 = vld [vmem:[#allocation3] sm:$0xff]
          %506 = vset.pattern.permute.xlu0 0
          %507 = vperm.xlu0 %506, %v504
          %v508 = vpop.permute.xlu0 %507
          %v510 = vrcp.pop %v508
          %v511 = vmul.f32 %v503, %v510
          %512 = vst.msk [vmem:[%s294] sm:$0xff] %vm309, %v511
        $region52: #{tpu_custom_call.1} parent=31 // pred_fallthru
          _
        %s513 = sand.u32 %s136, 1
        %s514 = scalar_lea.sflag [#allocation7], %s513
        %s515 = sand.u32 %s136, 1
        %s516 = smul.addr %s515, 8
        %s517 = scalar_lea.vmem [#allocation11], %s516
        // Predicated region
        $region53: #{tpu_custom_call.1} parent=31 // pred_check
          %p518 = pneg %p146
        $region54: #{tpu_custom_call.1} parent=31 // pred_check_branch
          %520 = sbr.rel (%p518) target = $region56
        $region55: #{tpu_custom_call.1} parent=31 // pred_region
          %s522 = ssub.s32 128, 128
          %523 = vsyncadd %s514, %s522
          %s524 = sadd.s32 %s29, %s28
          %s525 = smul.addr %s524, 128
          %s526 = scalar_lea.hbm %s3, %s525
          %s528 = sshll.u32 %s517, 4
          %s529 = int_to_ptr.vmem [resolvable:$true] %s528
          %531 = dma.vmem_to_hbm [thread:$0]  %s529, 128, %s526, %s514
        $region56: #{tpu_custom_call.1} parent=31 // pred_fallthru
          _
      $region32: #{tpu_custom_call.1} parent=5 // pred_fallthru
        _
      %p532 = scmp.le.s32.totalorder 2, %s18
      // Predicated region
      $region57: #{tpu_custom_call.1} parent=5 // pred_check
        %p533 = pneg %p532
      $region58: #{tpu_custom_call.1} parent=5 // pred_check_branch
        %535 = sbr.rel (%p533) target = $region60
      $region59: #{tpu_custom_call.1} parent=5 // pred_region
        %s536 = ssub.s32 %s18, 2
        // Predicated region
        $region61: #{tpu_custom_call.1} parent=59 // pred_check
          %p537 = pneg %p152
        $region62: #{tpu_custom_call.1} parent=59 // pred_check_branch
          %539 = sbr.rel (%p537) target = $region64
        $region63: #{tpu_custom_call.1} parent=59 // pred_region
          %s540 = sand.u32 %s137, 1
          %s541 = scalar_lea.sflag [#allocation7], %s540
          %s542 = sand.u32 %s137, 1
          %s543 = smul.addr %s542, 8
          %s544 = scalar_lea.vmem [#allocation11], %s543
          %545 = dma.done %s541, 128
        $region64: #{tpu_custom_call.1} parent=59 // pred_fallthru
          _
      $region60: #{tpu_custom_call.1} parent=5 // pred_fallthru
        _
    $region6: #{tpu_custom_call.1} parent=1 // loop_footer
      %s22 = sadd.s32 1, %s18
    $region7: #{tpu_custom_call.1} parent=1 // loop_footer_branch
      %17 = sbr.rel target = $region3
    $region8: #{tpu_custom_call.1} parent=1 // loop_exit
      _
    %546 = vsyncpa [#allocation6], 1
    %s547 = scalar_lea.sflag [#allocation6], 1
    %548 = vsyncpa %s547, 1
    %549 = vsyncpa [#allocation9], 1
    %s550 = scalar_lea.sflag [#allocation9], 1
    %551 = vsyncpa %s550, 1
    %552 = vsyncpa [#allocation7], 1
    %s553 = scalar_lea.sflag [#allocation7], 1
    %554 = vsyncpa %s553, 1

</llo_original>
